<compile_context>
chip_gen: v5e
topology: v5e:2x2
jax: 0.10.0
libtpu: 0.0.40
codegen_flags: <defaults>
</compile_context>

<pallas_src>
import functools

import jax
import jax.numpy as jnp
from jax.experimental import pallas as pl
from jax.experimental.pallas import tpu as pltpu


# --------------------------------------------------------------------------
# Kernels
# --------------------------------------------------------------------------
def _linear_kernel(x_ref, w_ref, b_ref, o_ref, *, compute_dtype):
    """Full-K path: one MXU matmul + fused bias per (tm, tn) output tile."""
    x = x_ref[...]
    if compute_dtype is not None and x.dtype != compute_dtype:
        x = x.astype(compute_dtype)          # per-tile cast, no XLA pre-pass
    o_ref[...] = (
        jnp.dot(x, w_ref[...], preferred_element_type=jnp.float32)
        + b_ref[...]                          # bias already f32
    ).astype(o_ref.dtype)


def _linear_kernel_ksplit(x_ref, w_ref, b_ref, o_ref, acc_ref, *, compute_dtype):
    """Fallback for very large D: K is the trailing (reduction) grid axis."""
    k = pl.program_id(2)

    @pl.when(k == 0)
    def _():
        # Initialise the accumulator with the broadcast bias: removes the
        # bias add from the unpipelined last-K epilogue.
        acc_ref[...] = jnp.broadcast_to(b_ref[...], acc_ref.shape)

    x = x_ref[...]
    if compute_dtype is not None and x.dtype != compute_dtype:
        x = x.astype(compute_dtype)
    acc_ref[...] += jnp.dot(x, w_ref[...], preferred_element_type=jnp.float32)

    @pl.when(k == pl.num_programs(2) - 1)
    def _():
        o_ref[...] = acc_ref[...].astype(o_ref.dtype)


# --------------------------------------------------------------------------
# Helpers
# --------------------------------------------------------------------------
def _pick_tile(total: int, preferred: int, align: int) -> int:
    """Largest tile <= preferred that divides `total` and is a multiple of
    `align`; falls back to the full extent (always a legal block dim)."""
    t = min(preferred, total)
    t -= t % align
    while t >= align:
        if total % t == 0:
            return t
        t -= align
    return total


def _vmem_budget() -> int:
    """~75% of physical VMEM (v7x: ~48 MiB, v5e/v6e: ~96 MiB)."""
    cap = 128 * 1024 * 1024
    try:
        cap = pltpu.get_tpu_info().vmem_capacity_bytes
    except Exception:
        pass
    return int(0.75 * cap)


# --------------------------------------------------------------------------
# Wrapper
# --------------------------------------------------------------------------
def key_layer_pallas(x, w_t, b, *, tm=512, tn=1024, tk_max=2048,
                     compute_dtype=None, out_dtype=None):
    """x: [B, S, D], w_t: [D, D*n_heads], b: [D*n_heads] -> [B, S, D*n_heads]."""
    B, S, D = x.shape
    Dw, N = w_t.shape
    assert Dw == D, "w_t must be the transposed nn.Linear weight [D, D*n_heads]"
    M = B * S
    out_dtype = x.dtype if out_dtype is None else out_dtype

    x2 = x.reshape(M, D)
    b2 = b.astype(jnp.float32).reshape(1, N)   # bias added in f32 in-kernel

    # Weights: cast once to the compute dtype.  In a real model pre-convert /
    # cache the bf16 (or fp8) weights at load time instead of per call.
    # TODO(synk): fp8 weight + per-channel scale path for v7x inference.
    if compute_dtype is not None and w_t.dtype != compute_dtype:
        w_t = w_t.astype(compute_dtype)
    x_dtype = x2.dtype
    w_dtype = w_t.dtype
    sub_align = 16 if jnp.dtype(x_dtype).itemsize < 4 else 8

    # ---- pad N / D up to lane multiples only when large and misaligned ----
    # (small dims use the legal full-extent block; padding K with zeros is
    #  exact, padded N columns are sliced off after the call)
    pad_n = (128 - N % 128) if (N > 128 and N % 128 != 0) else 0
    if pad_n:
        w_t = jnp.pad(w_t, ((0, 0), (0, pad_n)))
        b2 = jnp.pad(b2, ((0, 0), (0, pad_n)))
    Np = N + pad_n
    pad_d = (128 - D % 128) if (D > 128 and D % 128 != 0) else 0
    if pad_d:
        x2 = jnp.pad(x2, ((0, 0), (0, pad_d)))
        w_t = jnp.pad(w_t, ((0, pad_d), (0, 0)))
    Dp = D + pad_d

    # ---- tile selection ----------------------------------------------------
    tk = Dp if Dp <= tk_max else _pick_tile(Dp, tk_max, 128)   # full-K default
    tn = _pick_tile(Np, tn, 128)                               # lane-dense
    if M <= tm:
        tm = M                                                 # full extent
    else:
        tm = max(tm - tm % sub_align, sub_align)

    budget = _vmem_budget()

    def estimate(tm_, tn_, tk_):
        xi = jnp.dtype(x_dtype).itemsize
        wi = jnp.dtype(w_dtype).itemsize
        oi = jnp.dtype(out_dtype).itemsize
        acc = tm_ * tn_ * 4 if (Dp // tk_) > 1 else 0
        return (2 * tm_ * tk_ * xi + 2 * tk_ * tn_ * wi
                + 2 * tm_ * tn_ * oi + acc + 2 * tn_ * 4)

    # Shrink tiles until they fit the generation-aware VMEM budget.
    while estimate(tm, tn, tk) > budget:
        if tn > 128:
            tn = _pick_tile(Np, max(128, tn // 2), 128)
        elif tm > sub_align and tm != M:
            tm = max(sub_align, tm // 2)
        elif tk > 128:
            tk = _pick_tile(Dp, max(128, tk // 2), 128)
        else:
            break

    m_blocks = pl.cdiv(M, tm)       # partial last M block is masked on write
    n_blocks = Np // tn
    k_blocks = Dp // tk

    # v7x has 2 TensorCores sharded over the 'parallel' axes: avoid a
    # single-block grid when N can be split into >=2 lane-aligned tiles.
    if m_blocks * n_blocks < 2 and Np >= 256 and Np % 256 == 0:
        tn = _pick_tile(Np, Np // 2, 128)
        n_blocks = Np // tn

    est = estimate(tm, tn, tk)
    vmem_limit = int(min(budget, max(2 * est, 32 * 1024 * 1024)))

    xi = jnp.dtype(x_dtype).itemsize
    wi = jnp.dtype(w_dtype).itemsize
    oi = jnp.dtype(out_dtype).itemsize
    cost = pl.CostEstimate(
        flops=2 * M * Dp * Np,
        transcendentals=0,
        bytes_accessed=M * Dp * xi + Dp * Np * wi + Np * 4 + M * Np * oi,
    )

    if k_blocks == 1:
        # ---- full-K, 2-D grid, column-stationary W -------------------------
        # N axis is OUTERMOST: the W block index is constant across the inner
        # M loop, so each (Dp, tn) weight block is DMA'd from HBM exactly once.
        kernel = functools.partial(_linear_kernel, compute_dtype=compute_dtype)
        grid = (n_blocks, m_blocks)
        in_specs = [
            pl.BlockSpec((tm, Dp), lambda j, i: (i, 0)),
            pl.BlockSpec((Dp, tn), lambda j, i: (0, j)),
            pl.BlockSpec((1, tn), lambda j, i: (0, j)),
        ]
        out_spec = pl.BlockSpec((tm, tn), lambda j, i: (i, j))
        scratch = []
        semantics = ("parallel", "parallel")
    else:
        # ---- fallback for very large D: trailing reduction axis ------------
        kernel = functools.partial(_linear_kernel_ksplit,
                                   compute_dtype=compute_dtype)
        grid = (n_blocks, m_blocks, k_blocks)
        in_specs = [
            pl.BlockSpec((tm, tk), lambda j, i, k: (i, k)),
            pl.BlockSpec((tk, tn), lambda j, i, k: (k, j)),
            pl.BlockSpec((1, tn), lambda j, i, k: (0, j)),
        ]
        out_spec = pl.BlockSpec((tm, tn), lambda j, i, k: (i, j))
        scratch = [pltpu.VMEM((tm, tn), jnp.float32)]
        semantics = ("parallel", "parallel", "arbitrary")

    out = pl.pallas_call(
        kernel,
        out_shape=jax.ShapeDtypeStruct((M, Np), out_dtype),
        grid_spec=pltpu.PrefetchScalarGridSpec(
            num_scalar_prefetch=0,
            grid=grid,
            in_specs=in_specs,
            out_specs=out_spec,
            scratch_shapes=scratch,
        ),
        compiler_params=pltpu.CompilerParams(
            dimension_semantics=semantics,
            vmem_limit_bytes=vmem_limit,
        ),
        cost_estimate=cost,
    )(x2, w_t, b2)

    if pad_n:
        out = out[:, :N]
    return out.reshape(B, S, N)


# --------------------------------------------------------------------------
# Demo / self-test
# --------------------------------------------------------------------------
if __name__ == "__main__":
    # Small shapes consistent with the module: d_model=32, n_heads=4.
    B, S, d_model, n_heads = 2, 8, 32, 4
    key = jax.random.PRNGKey(0)
    kx, kw, kb = jax.random.split(key, 3)

    x = jax.random.normal(kx, (B, S, d_model), dtype=jnp.float32)
    # nn.Linear(d_model, d_model*n_heads): weight [out, in], bias [out].
    bound = 1.0 / (d_model ** 0.5)
    w = jax.random.uniform(kw, (d_model * n_heads, d_model),
                           minval=-bound, maxval=bound, dtype=jnp.float32)
    b = jax.random.uniform(kb, (d_model * n_heads,),
                           minval=-bound, maxval=bound, dtype=jnp.float32)

    # f32 path, tight tolerance vs. the torch-Linear math.
    out = jax.block_until_ready(key_layer_pallas(x, w.T, b))
    ref = x @ w.T + b
    assert out.shape == (B, S, d_model * n_heads)
    assert jnp.allclose(out, ref, atol=1e-5, rtol=1e-5)

    # Ragged M (B*S not tile-aligned): no pad pass, full-extent M block.
    x_odd = jax.random.normal(kx, (2, 7, d_model), dtype=jnp.float32)
    out_odd = jax.block_until_ready(key_layer_pallas(x_odd, w.T, b))
    ref_odd = x_odd @ w.T + b
    assert out_odd.shape == (2, 7, d_model * n_heads)
    assert jnp.allclose(out_odd, ref_odd, atol=1e-5, rtol=1e-5)

    # bf16 compute path (v6e/v7x fast path): w pre-cast once, x cast per-tile
    # in-kernel, f32 accumulate. Loose tolerance.
    out_bf16 = jax.block_until_ready(
        key_layer_pallas(x, w.T, b, compute_dtype=jnp.bfloat16))
    ref_bf16 = (x.astype(jnp.bfloat16).astype(jnp.float32)
                @ w.T.astype(jnp.bfloat16).astype(jnp.float32)) + b
    assert jnp.allclose(out_bf16, ref_bf16, atol=1e-2, rtol=1e-2)

    print("KERNEL_OK")
</pallas_src>

<mosaic_0001>
module attributes {stable_mosaic.version = 11 : i64} {
  func.func @_linear_kernel(%arg0: i32, %arg1: i32, %arg2: memref<16x32xf32, #tpu.memory_space<vmem>>, %arg3: memref<32x128xf32, #tpu.memory_space<vmem>>, %arg4: memref<1x128xf32, #tpu.memory_space<vmem>>, %arg5: memref<16x128xf32, #tpu.memory_space<vmem>>) attributes {dimension_semantics = [#tpu.dimension_semantics<parallel>, #tpu.dimension_semantics<parallel>], iteration_bounds = array<i64: 1, 1>, scalar_prefetch = 0 : i64, scratch_operands = 0 : i64, tpu.core_type = #tpu.core_type<tc>, window_params = [{transform_indices = @transform_0, window_bounds = array<i64: 16, 32>}, {transform_indices = @transform_1, window_bounds = array<i64: 32, 128>}, {transform_indices = @transform_2, window_bounds = array<i64: 1, 128>}, {transform_indices = @transform_3, window_bounds = array<i64: 16, 128>}]} {
    %c0 = arith.constant 0 : index
    %c0_0 = arith.constant 0 : index
    %0 = vector.load %arg2[%c0, %c0_0] : memref<16x32xf32, #tpu.memory_space<vmem>>, vector<16x32xf32>
    %c0_1 = arith.constant 0 : index
    %c0_2 = arith.constant 0 : index
    %1 = vector.load %arg3[%c0_1, %c0_2] : memref<32x128xf32, #tpu.memory_space<vmem>>, vector<32x128xf32>
    %cst = arith.constant dense<0.000000e+00> : vector<16x128xf32>
    %2 = tpu.matmul %0, %1, %cst {dimension_numbers = #tpu.dot_dimension_numbers<[1], [0], [0], [1], [0, 0, 1, 1], [], []>} : vector<16x32xf32>, vector<32x128xf32>, vector<16x128xf32> -> vector<16x128xf32>
    %c0_3 = arith.constant 0 : index
    %c0_4 = arith.constant 0 : index
    %3 = vector.load %arg4[%c0_3, %c0_4] : memref<1x128xf32, #tpu.memory_space<vmem>>, vector<1x128xf32>
    %4 = vector.broadcast %3 : vector<1x128xf32> to vector<16x128xf32>
    %5 = arith.addf %2, %4 : vector<16x128xf32>
    %c0_5 = arith.constant 0 : index
    %c0_6 = arith.constant 0 : index
    %6 = vector.load %arg5[%c0_5, %c0_6] : memref<16x128xf32, #tpu.memory_space<vmem>>, vector<16x128xf32>
    tpu.vector_store %arg5[%c0_5, %c0_6], %5 {strides = array<i32>} : memref<16x128xf32, #tpu.memory_space<vmem>>, vector<16x128xf32>,
    return
  }
  func.func @transform_0(%arg0: i32, %arg1: i32) -> (i32, i32) {
    %c0_i32 = arith.constant 0 : i32
    %c0_i32_0 = arith.constant 0 : i32
    return %arg1, %c0_i32 : i32, i32
  }
  func.func @transform_1(%arg0: i32, %arg1: i32) -> (i32, i32) {
    %c0_i32 = arith.constant 0 : i32
    %c0_i32_0 = arith.constant 0 : i32
    return %c0_i32, %arg0 : i32, i32
  }
  func.func @transform_2(%arg0: i32, %arg1: i32) -> (i32, i32) {
    %c0_i32 = arith.constant 0 : i32
    %c0_i32_0 = arith.constant 0 : i32
    return %c0_i32, %arg0 : i32, i32
  }
  func.func @transform_3(%arg0: i32, %arg1: i32) -> (i32, i32) {
    %c0_i32 = arith.constant 0 : i32
    return %arg1, %arg0 : i32, i32
  }
}

</mosaic_0001>

<llo_original>
// kernel: tpu_custom_call.1
$region0: #{tpu_custom_call.1}
  #allocation0 [shape = 'u32[]', space=smem, size = 0x4, offset = 0x4, fixed_abs, tag = 'smem constant byte address 0x4 - core index']
  #allocation1 [shape = 'u32[72,128]{1,0:T(1,128)}', space=vmem, size = 0x9000, scoped, tag = 'internal scratch']
  %s0 = inlined_call_operand.hbm [shape: f32[16,32], index: 0, kind: input, shape index: {}]
  %s1 = inlined_call_operand.hbm [shape: f32[32,128], index: 1, kind: input, shape index: {}]
  %s2 = inlined_call_operand.vmem [shape: f32[1,128], index: 2, kind: input, shape index: {}]
  %s3 = inlined_call_operand.hbm [shape: f32[16,128], index: 3, kind: output, shape index: {}]
  %s4 = sld [smem:[#allocation0]]
  $region30: #{tpu_custom_call.1} parent=0
    _
  %s6 = ssub.s32 1, %s4
  %s7 = scalar_select 0, %s6, %s4
  $region1: #{tpu_custom_call.1} parent=0
    #allocation2 [shape = 'u8[8192]{0}', space=vmem, size = 0x2000, scoped, tag = 'input window, operand 0, single buffered']
    #allocation3 [shape = 's32[1]{0}', space=sflag, size = 0x4, scoped, tag = 'scoped memory for tpu_custom_call.1']
    #allocation4 [shape = 's32[1]{0}', space=sflag, size = 0x4, scoped, tag = 'scoped memory for tpu_custom_call.1']
    #allocation5 [shape = 'u8[16384]{0}', space=vmem, size = 0x4000, scoped, tag = 'input window, operand 1, single buffered']
    #allocation6 [shape = 's32[1]{0}', space=sflag, size = 0x4, scoped, tag = 'scoped memory for tpu_custom_call.1']
    #allocation7 [shape = 'u8[8192]{0}', space=vmem, size = 0x2000, scoped, tag = 'output window, operand 0, single buffered']
    %8 = vsyncpa [#allocation3], 0
    %9 = vsyncpa [#allocation6], 0
    %10 = vsyncpa [#allocation4], 0
    // Predicated region
    $region2: #{tpu_custom_call.1} parent=1 // pred_check
      _
    $region3: #{tpu_custom_call.1} parent=1 // pred_check_branch
      %12 = sbr.rel (0) target = $region5
    $region4: #{tpu_custom_call.1} parent=1 // pred_region
      %14 = vsyncadd [#allocation3], 0
      %s15 = sshll.u32 %s0, 4
      %s16 = int_to_ptr.hbm [resolvable:$true] %s15
      %s17 = sshll.u32 [#allocation2], 4
      %s18 = int_to_ptr.vmem [resolvable:$true] %s17
      %23 = dma.hbm_to_vmem [thread:$0]  %s16, 256, %s18, [#allocation3], 128, 128, 8
    $region5: #{tpu_custom_call.1} parent=1 // pred_fallthru
      _
    // Predicated region
    $region6: #{tpu_custom_call.1} parent=1 // pred_check
      _
    $region7: #{tpu_custom_call.1} parent=1 // pred_check_branch
      %25 = sbr.rel (0) target = $region9
    $region8: #{tpu_custom_call.1} parent=1 // pred_region
      %27 = vsyncadd [#allocation6], 0
      %s28 = sshll.u32 %s1, 4
      %s29 = int_to_ptr.hbm [resolvable:$true] %s28
      %s30 = sshll.u32 [#allocation5], 4
      %s31 = int_to_ptr.vmem [resolvable:$true] %s30
      %36 = dma.hbm_to_vmem [thread:$0]  %s29, 512, %s31, [#allocation6], 128, 128, 8
    $region9: #{tpu_custom_call.1} parent=1 // pred_fallthru
      _
    // Predicated region
    $region10: #{tpu_custom_call.1} parent=1 // pred_check
      _
    $region11: #{tpu_custom_call.1} parent=1 // pred_check_branch
      %38 = sbr.rel (0) target = $region13
    $region12: #{tpu_custom_call.1} parent=1 // pred_region
      _
    $region13: #{tpu_custom_call.1} parent=1 // pred_fallthru
      _
    // Predicated region
    $region14: #{tpu_custom_call.1} parent=1 // pred_check
      _
    $region15: #{tpu_custom_call.1} parent=1 // pred_check_branch
      %40 = sbr.rel (0) target = $region17
    $region16: #{tpu_custom_call.1} parent=1 // pred_region
      %42 = dma.done [#allocation3], 256
    $region17: #{tpu_custom_call.1} parent=1 // pred_fallthru
      _
    // Predicated region
    $region18: #{tpu_custom_call.1} parent=1 // pred_check
      _
    $region19: #{tpu_custom_call.1} parent=1 // pred_check_branch
      %44 = sbr.rel (0) target = $region21
    $region20: #{tpu_custom_call.1} parent=1 // pred_region
      %46 = dma.done [#allocation6], 512
    $region21: #{tpu_custom_call.1} parent=1 // pred_fallthru
      _
    %v47 = vld [vmem:[#allocation2] sm:$0xff]
    %v48 = vld [vmem:[#allocation2 + $0x8] sm:$0xff]
    %v49 = vld [vmem:[#allocation5] sm:$0xff]
    %v50 = vld [vmem:[#allocation5 + $0x8] sm:$0xff]
    %v51 = vld [vmem:[#allocation5 + $0x10] sm:$0xff]
    %v52 = vld [vmem:[#allocation5 + $0x18] sm:$0xff]
    %v53 = vld [vmem:[%s2] sm:$0x1]
    %v55 = vperm.slane %v53, 0
    %vm57 = vcmask 261120
    %v59 = vsel %vm57, %v47, 0
    %v62 = vsel %vm57, %v48, 0
    %64 = vmatpush.msra.mxu0 0.0
    %65 = vmatpush.msra.mxu0 0.0
    %66 = vmatpush.msra.mxu0 0.0
    %67 = vmatpush.msra.mxu0 0.0
    %68 = vmatpush.msra.mxu0 0.0
    %69 = vmatpush.msra.mxu0 0.0
    %70 = vmatpush.msra.mxu0 0.0
    %71 = vmatpush.msra.mxu0 0.0
    %72 = vmatpush.msra.mxu0 0.0
    %73 = vmatpush.msra.mxu0 0.0
    %74 = vmatpush.msra.mxu0 0.0
    %75 = vmatpush.msra.mxu0 0.0
    %76 = vmatpush.msra.mxu0 %v52
    %77 = vmatpush.msra.mxu0 %v51
    %78 = vmatpush.msra.mxu0 %v50
    %79 = vmatpush.msra.mxu0 %v49
    %80 = vmatmul.f32.gmra.mxu0 %v59
    %v81 = vpop.f32.mrf.mxu0
    %v82 = vadd.f32 %v55, %v81
    %83 = vmatmul.f32.gmra.mxu0 %v62
    %v84 = vpop.f32.mrf.mxu0
    %v85 = vadd.f32 %v55, %v84
    %86 = vdwg.mxu0
    %87 = vst [vmem:[#allocation7] sm:$0xff] %v82
    %88 = vst [vmem:[#allocation7 + $0x8] sm:$0xff] %v85
    // Predicated region
    $region22: #{tpu_custom_call.1} parent=1 // pred_check
      _
    $region23: #{tpu_custom_call.1} parent=1 // pred_check_branch
      %90 = sbr.rel (0) target = $region25
    $region24: #{tpu_custom_call.1} parent=1 // pred_region
      %92 = vsyncadd [#allocation4], 0
      %s93 = sshll.u32 [#allocation7], 4
      %s94 = int_to_ptr.vmem [resolvable:$true] %s93
      %s95 = sshll.u32 %s3, 4
      %s96 = int_to_ptr.hbm [resolvable:$true] %s95
      %101 = dma.vmem_to_hbm [thread:$0]  %s94, 256, %s96, [#allocation4], 128, 128, 8
    $region25: #{tpu_custom_call.1} parent=1 // pred_fallthru
      _
    // Predicated region
    $region26: #{tpu_custom_call.1} parent=1 // pred_check
      _
    $region27: #{tpu_custom_call.1} parent=1 // pred_check_branch
      %103 = sbr.rel (0) target = $region29
    $region28: #{tpu_custom_call.1} parent=1 // pred_region
      %105 = dma.done [#allocation4], 256
    $region29: #{tpu_custom_call.1} parent=1 // pred_fallthru
      _
    %106 = vsyncpa [#allocation3], 1
    %107 = vsyncpa [#allocation6], 1
    %108 = vsyncpa [#allocation4], 1

</llo_original>
